<compile_context>
chip_gen: v5e
topology: v5e:2x2
jax: 0.10.0
libtpu: 0.0.40
codegen_flags: <defaults>
</compile_context>

<pallas_src>
import functools

import jax
import jax.numpy as jnp
from jax.experimental import pallas as pl
from jax.experimental.pallas import tpu as pltpu

LANES = 128
SUBLANES = 8
NEG_BIG = -3.0e38  # finite "-inf": keeps masked / never-touched slots NaN-free


def _round_up(x, m):
    return ((x + m - 1) // m) * m


def _default_num_shards():
    """2 shards only on 2-TensorCore chips (v7x); 1 on v5e/v6e."""
    try:
        kind = jax.devices()[0].device_kind.lower()
    except Exception:
        return 1
    return 2 if ("v7" in kind or "7x" in kind) else 1


def _wmse_kernel(y_ref, yp_ref, coef_ref, m_ref, s_ref, *,
                 steps, tile, valid_rows, needs_mask):
    """Online-max accumulation of max(logit) and sum(exp(logit-max)*diff^2)."""
    c = pl.program_id(0)   # shard axis (one per TensorCore on v7x)
    j = pl.program_id(1)   # reduction axis ("arbitrary")

    @pl.when(j == 0)
    def _init():
        m_ref[...] = jnp.full_like(m_ref, NEG_BIG)
        s_ref[...] = jnp.zeros_like(s_ref)

    y = y_ref[...].astype(jnp.float32)
    yp = yp_ref[...].astype(jnp.float32)

    a = coef_ref[0:1, :]       # std * (-1/Eref)
    b = coef_ref[1:2, :]       # mean * (-1/Eref)
    std = coef_ref[2:3, :]     # std

    logit = y * a + b          # == -yd / Eref
    diff = (y - yp) * std      # == yd - yd_pred
    d2 = diff * diff

    def accumulate(lg, dd):
        # Group rows by sublane so all cross-row reductions are elementwise
        # max/add across vregs (pure VALU work, no XLU cross-lane reduce).
        g = tile // SUBLANES
        lg3 = lg.reshape(g, SUBLANES, LANES)
        dd3 = dd.reshape(g, SUBLANES, LANES)
        t_max = jnp.max(lg3, axis=0)           # (8, 128) tile-local max
        m_old = m_ref[...]
        m_new = jnp.maximum(m_old, t_max)
        contrib = jnp.sum(jnp.exp(lg3 - m_new) * dd3, axis=0)
        s_ref[...] = s_ref[...] * jnp.exp(m_old - m_new) + contrib
        m_ref[...] = m_new

    if needs_mask:  # static python branch; only compiled when a ragged tail exists
        start = (c * steps + j) * tile
        is_partial = start + tile > valid_rows

        @pl.when(jnp.logical_not(is_partial))
        def _fast():  # full blocks: no per-element mask work
            accumulate(logit, d2)

        @pl.when(is_partial)
        def _masked():
            # Mask BEFORE exp/multiply: the OOB tail of the block is undefined
            # (possibly NaN/Inf) stale VMEM; both selects are required.
            row = jax.lax.broadcasted_iota(jnp.int32, (tile, LANES), 0) + start
            valid = row < valid_rows
            accumulate(jnp.where(valid, logit, NEG_BIG),
                       jnp.where(valid, d2, 0.0))
    else:
        accumulate(logit, d2)


def wmse_loss_boltzmann(y, y_pred, y_mean, y_std, eref, *,
                        tile_rows=1024, num_shards=None):
    """Pallas equivalent of WMSELoss_Boltzmann.forward (after set_scale)."""
    y = jnp.asarray(y)
    y_pred = jnp.asarray(y_pred)
    n, d = y.shape
    total_elems = n * d
    # TODO(synk): general D / ragged N*D would need element-level padding+mask.
    assert total_elems % LANES == 0 and LANES % d == 0, (
        "N*D must be a multiple of 128 and D must divide 128")

    rows = total_elems // LANES
    rep = LANES // d

    mean = jnp.asarray(y_mean, jnp.float32).reshape(d)
    std = jnp.asarray(y_std, jnp.float32).reshape(d)
    neg_inv_eref = -1.0 / jnp.asarray(eref, jnp.float32)

    # lane-dense per-lane coefficients packed into one (8,128) block:
    #   row 0: a = std * (-1/Eref)   row 1: b = mean * (-1/Eref)   row 2: std
    std_t = jnp.tile(std, rep).reshape(1, LANES)
    a_row = std_t * neg_inv_eref
    b_row = (jnp.tile(mean, rep) * neg_inv_eref).reshape(1, LANES)
    coeff = jnp.zeros((SUBLANES, LANES), jnp.float32)
    coeff = coeff.at[0:1].set(a_row).at[1:2].set(b_row).at[2:3].set(std_t)

    # lane-dense data layout (free, row-major contiguous reshape; dtype kept —
    # bf16 inputs halve HBM traffic, kernel upcasts to f32 internally)
    y2 = y.reshape(rows, LANES)
    yp2 = y_pred.reshape(rows, LANES)

    # ---- static tile / shard choices ------------------------------------
    if num_shards is None:
        num_shards = _default_num_shards()
    num_shards = max(1, min(int(num_shards), pl.cdiv(rows, SUBLANES)))

    tile_cap = max(SUBLANES, (int(tile_rows) // SUBLANES) * SUBLANES)
    # pick tile AFTER fixing num_shards so every shard (TensorCore) gets work
    tile = min(tile_cap, _round_up(pl.cdiv(rows, num_shards), SUBLANES))
    steps = pl.cdiv(rows, num_shards * tile)
    # rebalance so the last step is not mostly empty
    tile = min(tile, _round_up(pl.cdiv(rows, num_shards * steps), SUBLANES))
    covered = num_shards * steps * tile
    needs_mask = covered != rows
    # blocks whose start is past the array end (possible with >1 shard): clamp
    # their DMA to the last real block; the in-kernel mask zeroes them out.
    has_oob_blocks = (num_shards * steps - 1) * tile >= rows

    if needs_mask and has_oob_blocks:
        last_block = pl.cdiv(rows, tile) - 1
        def row_index(c, j, _s=steps, _lb=last_block):
            return (jnp.minimum(c * _s + j, _lb), 0)
    else:
        def row_index(c, j, _s=steps):
            return (c * _s + j, 0)

    row_spec = pl.BlockSpec((tile, LANES), row_index)
    coef_spec = pl.BlockSpec((SUBLANES, LANES), lambda c, j: (0, 0))
    acc_spec = pl.BlockSpec((SUBLANES, LANES), lambda c, j: (c, 0))

    kernel = functools.partial(_wmse_kernel, steps=steps, tile=tile,
                               valid_rows=rows, needs_mask=needs_mask)

    in_bytes = (y2.size * y2.dtype.itemsize + yp2.size * yp2.dtype.itemsize
                + coeff.size * 4)
    out_bytes = 2 * num_shards * SUBLANES * LANES * 4
    cost = pl.CostEstimate(flops=10 * total_elems,
                           transcendentals=total_elems,
                           bytes_accessed=int(in_bytes + out_bytes))

    def _launch(shard_sem):
        return pl.pallas_call(
            kernel,
            out_shape=(
                jax.ShapeDtypeStruct((num_shards * SUBLANES, LANES), jnp.float32),
                jax.ShapeDtypeStruct((num_shards * SUBLANES, LANES), jnp.float32),
            ),
            grid=(num_shards, steps),
            in_specs=[row_spec, row_spec, coef_spec],
            out_specs=(acc_spec, acc_spec),
            compiler_params=pltpu.CompilerParams(
                dimension_semantics=(shard_sem, pltpu.ARBITRARY)),
            cost_estimate=cost,
        )(y2, yp2, coeff)

    if num_shards > 1:
        try:
            # v7x: map the shard axis onto both TensorCores.
            m_part, s_part = _launch(pltpu.CORE_PARALLEL)
        except Exception:
            m_part, s_part = _launch(pltpu.PARALLEL)
    else:
        m_part, s_part = _launch(pltpu.ARBITRARY)

    # tiny final combine across shards / sublanes / lanes (exact, shift-stable)
    m_max = jnp.max(m_part)
    total = jnp.sum(s_part * jnp.exp(m_part - m_max))
    return total / jnp.float32(total_elems)


def _reference(y, y_pred, y_mean, y_std, eref):
    yd = y * y_std + y_mean
    yd_pred = y_pred * y_std + y_mean
    w = jnp.exp(-yd / eref)
    w = w / jnp.max(w)
    return jnp.mean(w * (yd - yd_pred) ** 2)


if __name__ == "__main__":
    key = jax.random.PRNGKey(0)
    Eref = 2.0  # Boltzmann reference energy (scalar, as in __init__)

    # (128, 8): rows divide evenly (mask code not emitted); (144, 8) and
    # (1000, 16): exercise the partial last block / runtime-masked path.
    for N, D in [(128, 8), (144, 8), (1000, 16)]:
        ks = jax.random.split(jax.random.fold_in(key, N * 131 + D), 4)
        y = jax.random.normal(ks[0], (N, D), dtype=jnp.float32)
        y_pred = y + 0.1 * jax.random.normal(ks[1], (N, D), dtype=jnp.float32)
        # set_scale() analogue: deterministic per-target mean/std
        y_mean = 1.0 + 0.1 * jax.random.normal(ks[2], (D,), dtype=jnp.float32)
        y_std = 0.5 + 0.05 * jax.random.uniform(ks[3], (D,), dtype=jnp.float32)

        wmse = wmse_loss_boltzmann(y, y_pred, y_mean, y_std, Eref)
        wmse = jax.block_until_ready(wmse)

        ref = _reference(y, y_pred, y_mean.reshape(1, D),
                         y_std.reshape(1, D), Eref)
        assert jnp.allclose(wmse, ref, rtol=1e-4, atol=1e-6), (N, D, wmse, ref)

    print("KERNEL_OK")
</pallas_src>

<mosaic_0001>
module attributes {stable_mosaic.version = 11 : i64} {
  func.func @_wmse_kernel(%arg0: i32, %arg1: i32, %arg2: memref<8x128xf32, #tpu.memory_space<vmem>>, %arg3: memref<8x128xf32, #tpu.memory_space<vmem>>, %arg4: memref<8x128xf32, #tpu.memory_space<vmem>>, %arg5: memref<8x128xf32, #tpu.memory_space<vmem>>, %arg6: memref<8x128xf32, #tpu.memory_space<vmem>>) attributes {dimension_semantics = [#tpu.dimension_semantics<arbitrary>, #tpu.dimension_semantics<arbitrary>], iteration_bounds = array<i64: 1, 1>, scalar_prefetch = 0 : i64, scratch_operands = 0 : i64, tpu.core_type = #tpu.core_type<tc>, window_params = [{transform_indices = @transform_0, window_bounds = array<i64: 8, 128>}, {transform_indices = @transform_1, window_bounds = array<i64: 8, 128>}, {pipeline_mode = #tpu.pipeline_mode<synchronous>, transform_indices = @transform_2, window_bounds = array<i64: 8, 128>}, {transform_indices = @transform_3, window_bounds = array<i64: 8, 128>}, {transform_indices = @transform_4, window_bounds = array<i64: 8, 128>}]} {
    %c0_i32 = arith.constant 0 : i32
    %0 = arith.cmpi eq, %arg1, %c0_i32 : i32
    %1 = arith.extui %0 : i1 to i32
    %c0_i32_0 = arith.constant 0 : i32
    %2 = arith.cmpi ne, %1, %c0_i32_0 : i32
    scf.if %2 {
      %cst_17 = arith.constant -3.000000e+38 : f32
      %33 = vector.broadcast %cst_17 : f32 to vector<8x128xf32>
      %c0_18 = arith.constant 0 : index
      %c0_19 = arith.constant 0 : index
      %34 = vector.load %arg5[%c0_18, %c0_19] : memref<8x128xf32, #tpu.memory_space<vmem>>, vector<8x128xf32>
      tpu.vector_store %arg5[%c0_18, %c0_19], %33 {strides = array<i32>} : memref<8x128xf32, #tpu.memory_space<vmem>>, vector<8x128xf32>,
      %cst_20 = arith.constant 0.000000e+00 : f32
      %35 = vector.broadcast %cst_20 : f32 to vector<8x128xf32>
      %c0_21 = arith.constant 0 : index
      %c0_22 = arith.constant 0 : index
      %36 = vector.load %arg6[%c0_21, %c0_22] : memref<8x128xf32, #tpu.memory_space<vmem>>, vector<8x128xf32>
      tpu.vector_store %arg6[%c0_21, %c0_22], %35 {strides = array<i32>} : memref<8x128xf32, #tpu.memory_space<vmem>>, vector<8x128xf32>,
    } else {
    }
    %c0 = arith.constant 0 : index
    %c0_1 = arith.constant 0 : index
    %3 = vector.load %arg2[%c0, %c0_1] : memref<8x128xf32, #tpu.memory_space<vmem>>, vector<8x128xf32>
    %c0_2 = arith.constant 0 : index
    %c0_3 = arith.constant 0 : index
    %4 = vector.load %arg3[%c0_2, %c0_3] : memref<8x128xf32, #tpu.memory_space<vmem>>, vector<8x128xf32>
    %c0_4 = arith.constant 0 : index
    %c0_5 = arith.constant 0 : index
    %5 = vector.load %arg4[%c0_4, %c0_5] : memref<8x128xf32, #tpu.memory_space<vmem>>, vector<1x128xf32>
    %c1 = arith.constant 1 : index
    %c0_6 = arith.constant 0 : index
    %6 = vector.load %arg4[%c1, %c0_6] : memref<8x128xf32, #tpu.memory_space<vmem>>, vector<1x128xf32>
    %c2 = arith.constant 2 : index
    %c0_7 = arith.constant 0 : index
    %7 = vector.load %arg4[%c2, %c0_7] : memref<8x128xf32, #tpu.memory_space<vmem>>, vector<1x128xf32>
    %8 = vector.broadcast %5 : vector<1x128xf32> to vector<8x128xf32>
    %9 = arith.mulf %3, %8 : vector<8x128xf32>
    %10 = vector.broadcast %6 : vector<1x128xf32> to vector<8x128xf32>
    %11 = arith.addf %9, %10 : vector<8x128xf32>
    %12 = arith.subf %3, %4 : vector<8x128xf32>
    %13 = vector.broadcast %7 : vector<1x128xf32> to vector<8x128xf32>
    %14 = arith.mulf %12, %13 : vector<8x128xf32>
    %15 = arith.mulf %14, %14 : vector<8x128xf32>
    %16 = vector.shape_cast %11 : vector<8x128xf32> to vector<1x8x128xf32>
    %17 = vector.shape_cast %15 : vector<8x128xf32> to vector<1x8x128xf32>
    %cst = arith.constant dense<0xFF800000> : vector<8x128xf32>
    %18 = vector.multi_reduction <maximumf>, %16, %cst [0] : vector<1x8x128xf32> to vector<8x128xf32>
    %c0_8 = arith.constant 0 : index
    %c0_9 = arith.constant 0 : index
    %19 = vector.load %arg5[%c0_8, %c0_9] : memref<8x128xf32, #tpu.memory_space<vmem>>, vector<8x128xf32>
    %20 = arith.maximumf %19, %18 : vector<8x128xf32>
    %21 = vector.shape_cast %20 : vector<8x128xf32> to vector<1x8x128xf32>
    %22 = arith.subf %16, %21 : vector<1x8x128xf32>
    %23 = math.exp %22 : vector<1x8x128xf32>
    %24 = arith.mulf %23, %17 : vector<1x8x128xf32>
    %cst_10 = arith.constant dense<0.000000e+00> : vector<8x128xf32>
    %25 = vector.multi_reduction <add>, %24, %cst_10 [0] : vector<1x8x128xf32> to vector<8x128xf32>
    %c0_11 = arith.constant 0 : index
    %c0_12 = arith.constant 0 : index
    %26 = vector.load %arg6[%c0_11, %c0_12] : memref<8x128xf32, #tpu.memory_space<vmem>>, vector<8x128xf32>
    %27 = arith.subf %19, %20 : vector<8x128xf32>
    %28 = math.exp %27 : vector<8x128xf32>
    %29 = arith.mulf %26, %28 : vector<8x128xf32>
    %30 = arith.addf %29, %25 : vector<8x128xf32>
    %c0_13 = arith.constant 0 : index
    %c0_14 = arith.constant 0 : index
    %31 = vector.load %arg6[%c0_13, %c0_14] : memref<8x128xf32, #tpu.memory_space<vmem>>, vector<8x128xf32>
    tpu.vector_store %arg6[%c0_13, %c0_14], %30 {strides = array<i32>} : memref<8x128xf32, #tpu.memory_space<vmem>>, vector<8x128xf32>,
    %c0_15 = arith.constant 0 : index
    %c0_16 = arith.constant 0 : index
    %32 = vector.load %arg5[%c0_15, %c0_16] : memref<8x128xf32, #tpu.memory_space<vmem>>, vector<8x128xf32>
    tpu.vector_store %arg5[%c0_15, %c0_16], %20 {strides = array<i32>} : memref<8x128xf32, #tpu.memory_space<vmem>>, vector<8x128xf32>,
    return
  }
  func.func @transform_0(%arg0: i32, %arg1: i32) -> (i32, i32) {
    %c1_i32 = arith.constant 1 : i32
    %0 = arith.muli %arg0, %c1_i32 : i32
    %1 = arith.addi %0, %arg1 : i32
    %c0_i32 = arith.constant 0 : i32
    %c0_i32_0 = arith.constant 0 : i32
    return %1, %c0_i32 : i32, i32
  }
  func.func @transform_1(%arg0: i32, %arg1: i32) -> (i32, i32) {
    %c1_i32 = arith.constant 1 : i32
    %0 = arith.muli %arg0, %c1_i32 : i32
    %1 = arith.addi %0, %arg1 : i32
    %c0_i32 = arith.constant 0 : i32
    %c0_i32_0 = arith.constant 0 : i32
    return %1, %c0_i32 : i32, i32
  }
  func.func @transform_2(%arg0: i32, %arg1: i32) -> (i32, i32) {
    %c0_i32 = arith.constant 0 : i32
    %c0_i32_0 = arith.constant 0 : i32
    %c0_i32_1 = arith.constant 0 : i32
    return %c0_i32, %c0_i32_0 : i32, i32
  }
  func.func @transform_3(%arg0: i32, %arg1: i32) -> (i32, i32) {
    %c0_i32 = arith.constant 0 : i32
    %c0_i32_0 = arith.constant 0 : i32
    return %arg0, %c0_i32 : i32, i32
  }
  func.func @transform_4(%arg0: i32, %arg1: i32) -> (i32, i32) {
    %c0_i32 = arith.constant 0 : i32
    %c0_i32_0 = arith.constant 0 : i32
    return %arg0, %c0_i32 : i32, i32
  }
}

</mosaic_0001>

<llo_original>
// kernel: tpu_custom_call.1
$region0: #{tpu_custom_call.1}
  #allocation0 [shape = 'u32[]', space=smem, size = 0x4, offset = 0x4, fixed_abs, tag = 'smem constant byte address 0x4 - core index']
  #allocation1 [shape = 'u32[72,128]{1,0:T(1,128)}', space=vmem, size = 0x9000, scoped, tag = 'internal scratch']
  %s0 = inlined_call_operand.hbm [shape: f32[8,128], index: 0, kind: input, shape index: {}]
  %s1 = inlined_call_operand.hbm [shape: f32[8,128], index: 1, kind: input, shape index: {}]
  %s2 = inlined_call_operand.hbm [shape: f32[8,128], index: 2, kind: input, shape index: {}]
  %s3 = inlined_call_operand.hbm [shape: f32[8,128], index: 3, kind: output, shape index: {0}]
  %s4 = inlined_call_operand.hbm [shape: f32[8,128], index: 4, kind: output, shape index: {1}]
  %5 = xla_tuple %s3, %s4
  %s6 = sld [smem:[#allocation0]]
  $region46: #{tpu_custom_call.1} parent=0
    _
  %s8 = ssub.s32 1, %s6
  %s9 = scalar_select 0, %s8, %s6
  $region1: #{tpu_custom_call.1} parent=0
    #allocation2 [shape = 'u8[4096]{0}', space=vmem, size = 0x1000, scoped, tag = 'input window, operand 0, single buffered']
    #allocation3 [shape = 's32[1]{0}', space=sflag, size = 0x4, scoped, tag = 'scoped memory for tpu_custom_call.1']
    #allocation4 [shape = 's32[1]{0}', space=sflag, size = 0x4, scoped, tag = 'scoped memory for tpu_custom_call.1']
    #allocation5 [shape = 'u8[4096]{0}', space=vmem, size = 0x1000, scoped, tag = 'input window, operand 1, single buffered']
    #allocation6 [shape = 's32[1]{0}', space=sflag, size = 0x4, scoped, tag = 'scoped memory for tpu_custom_call.1']
    #allocation7 [shape = 'u8[4096]{0}', space=vmem, size = 0x1000, scoped, tag = 'input window, operand 2, single buffered']
    #allocation8 [shape = 'u8[4096]{0}', space=vmem, size = 0x1000, scoped, tag = 'output window, operand 0, single buffered']
    #allocation9 [shape = 'u8[4096]{0}', space=vmem, size = 0x1000, scoped, tag = 'output window, operand 1, single buffered']
    #allocation10 [shape = 's32[1]{0}', space=sflag, size = 0x4, scoped, tag = 'scoped memory for tpu_custom_call.1']
    %10 = vsyncpa [#allocation3], 0
    %11 = vsyncpa [#allocation6], 0
    %12 = vsyncpa [#allocation4], 0
    %13 = vsyncpa [#allocation10], 0
    // Predicated region
    $region2: #{tpu_custom_call.1} parent=1 // pred_check
      _
    $region3: #{tpu_custom_call.1} parent=1 // pred_check_branch
      %15 = sbr.rel (0) target = $region5
    $region4: #{tpu_custom_call.1} parent=1 // pred_region
      %s16 = sadd.s32 0, 0
      %18 = vsyncadd [#allocation3], 0
      %s19 = smul.addr %s16, 8
      %s20 = scalar_lea.hbm %s0, %s19
      %s22 = sshll.u32 %s20, 4
      %s23 = int_to_ptr.hbm [resolvable:$true] %s22
      %s24 = sshll.u32 [#allocation2], 4
      %s25 = int_to_ptr.vmem [resolvable:$true] %s24
      %27 = dma.hbm_to_vmem [thread:$0]  %s23, 128, %s25, [#allocation3]
    $region5: #{tpu_custom_call.1} parent=1 // pred_fallthru
      _
    // Predicated region
    $region6: #{tpu_custom_call.1} parent=1 // pred_check
      _
    $region7: #{tpu_custom_call.1} parent=1 // pred_check_branch
      %29 = sbr.rel (0) target = $region9
    $region8: #{tpu_custom_call.1} parent=1 // pred_region
      %s30 = sadd.s32 0, 0
      %32 = vsyncadd [#allocation6], 0
      %s33 = smul.addr %s30, 8
      %s34 = scalar_lea.hbm %s1, %s33
      %s36 = sshll.u32 %s34, 4
      %s37 = int_to_ptr.hbm [resolvable:$true] %s36
      %s38 = sshll.u32 [#allocation5], 4
      %s39 = int_to_ptr.vmem [resolvable:$true] %s38
      %41 = dma.hbm_to_vmem [thread:$0]  %s37, 128, %s39, [#allocation6]
    $region9: #{tpu_custom_call.1} parent=1 // pred_fallthru
      _
    // Predicated region
    $region10: #{tpu_custom_call.1} parent=1 // pred_check
      _
    $region11: #{tpu_custom_call.1} parent=1 // pred_check_branch
      %43 = sbr.rel (0) target = $region13
    $region12: #{tpu_custom_call.1} parent=1 // pred_region
      %45 = vsyncadd [#allocation6], 0
      %s47 = sshll.u32 %s2, 4
      %s48 = int_to_ptr.hbm [resolvable:$true] %s47
      %s49 = sshll.u32 [#allocation7], 4
      %s50 = int_to_ptr.vmem [resolvable:$true] %s49
      %52 = dma.hbm_to_vmem [thread:$0]  %s48, 128, %s50, [#allocation6]
    $region13: #{tpu_custom_call.1} parent=1 // pred_fallthru
      _
    // Predicated region
    $region14: #{tpu_custom_call.1} parent=1 // pred_check
      _
    $region15: #{tpu_custom_call.1} parent=1 // pred_check_branch
      %54 = sbr.rel (0) target = $region17
    $region16: #{tpu_custom_call.1} parent=1 // pred_region
      %56 = dma.done [#allocation3], 128
    $region17: #{tpu_custom_call.1} parent=1 // pred_fallthru
      _
    // Predicated region
    $region18: #{tpu_custom_call.1} parent=1 // pred_check
      _
    $region19: #{tpu_custom_call.1} parent=1 // pred_check_branch
      %58 = sbr.rel (0) target = $region21
    $region20: #{tpu_custom_call.1} parent=1 // pred_region
      %60 = dma.done [#allocation6], 128
    $region21: #{tpu_custom_call.1} parent=1 // pred_fallthru
      _
    // Predicated region
    $region22: #{tpu_custom_call.1} parent=1 // pred_check
      _
    $region23: #{tpu_custom_call.1} parent=1 // pred_check_branch
      %62 = sbr.rel (0) target = $region25
    $region24: #{tpu_custom_call.1} parent=1 // pred_region
      %64 = dma.done [#allocation6], 128
    $region25: #{tpu_custom_call.1} parent=1 // pred_fallthru
      _
    %s65 = sadd.s32 0, 0
    %s66 = sadd.s32 0, 0
    %p67 = scmp.eq.s32.totalorder 0, 0
    // Predicated region
    $region26: #{tpu_custom_call.1} parent=1 // pred_check
      %p68 = pneg %p67
    $region27: #{tpu_custom_call.1} parent=1 // pred_check_branch
      %70 = sbr.rel (%p68) target = $region29
    $region28: #{tpu_custom_call.1} parent=1 // pred_region
      %71 = vst [vmem:[#allocation8] sm:$0xff] -3e+38
      %72 = vst [vmem:[#allocation9] sm:$0xff] 0.0
    $region29: #{tpu_custom_call.1} parent=1 // pred_fallthru
      _
    %v73 = vld [vmem:[#allocation2] sm:$0xff]
    %v74 = vld [vmem:[#allocation5] sm:$0xff]
    %v75 = vld [vmem:[#allocation7] sm:$0x1]
    %v76 = vld [vmem:[#allocation7 + $0x1] sm:$0x1]
    %v77 = vld [vmem:[#allocation7 + $0x2] sm:$0x1]
    %v78 = vperm.slane %v75, 0
    %v79 = vmul.f32 %v73, %v78
    %v80 = vperm.slane %v76, 0
    %v81 = vadd.f32 %v79, %v80
    %v82 = vsub.f32 %v73, %v74
    %v83 = vperm.slane %v77, 0
    %v84 = vmul.f32 %v82, %v83
    %v85 = vmul.f32 %v84, %v84
    %v86 = vld [vmem:[#allocation8] sm:$0xff]
    %v87 = vmax.f32 %v86, %v81
    %v88 = vsub.f32 %v81, %v87
    %v89 = vmul.f32 %v88, 1.442695
    %v90 = vpow.pop %v89
    %v91 = vmul.f32 %v90, %v85
    %v92 = vadd.f32 %v91, 0.0
    %v93 = vld [vmem:[#allocation9] sm:$0xff]
    %v94 = vsub.f32 %v86, %v87
    %v95 = vmul.f32 %v94, 1.442695
    %v96 = vpow.pop %v95
    %v97 = vmul.f32 %v93, %v96
    %v98 = vadd.f32 %v97, %v92
    %99 = vst [vmem:[#allocation9] sm:$0xff] %v98
    %100 = vst [vmem:[#allocation8] sm:$0xff] %v87
    // Predicated region
    $region30: #{tpu_custom_call.1} parent=1 // pred_check
      _
    $region31: #{tpu_custom_call.1} parent=1 // pred_check_branch
      %102 = sbr.rel (0) target = $region33
    $region32: #{tpu_custom_call.1} parent=1 // pred_region
      %104 = vsyncadd [#allocation4], 0
      %s106 = sshll.u32 [#allocation8], 4
      %s107 = int_to_ptr.vmem [resolvable:$true] %s106
      %s108 = sshll.u32 %s3, 4
      %s109 = int_to_ptr.hbm [resolvable:$true] %s108
      %111 = dma.vmem_to_hbm [thread:$0]  %s107, 128, %s109, [#allocation4]
    $region33: #{tpu_custom_call.1} parent=1 // pred_fallthru
      _
    // Predicated region
    $region34: #{tpu_custom_call.1} parent=1 // pred_check
      _
    $region35: #{tpu_custom_call.1} parent=1 // pred_check_branch
      %113 = sbr.rel (0) target = $region37
    $region36: #{tpu_custom_call.1} parent=1 // pred_region
      %115 = vsyncadd [#allocation10], 0
      %s117 = sshll.u32 [#allocation9], 4
      %s118 = int_to_ptr.vmem [resolvable:$true] %s117
      %s119 = sshll.u32 %s4, 4
      %s120 = int_to_ptr.hbm [resolvable:$true] %s119
      %122 = dma.vmem_to_hbm [thread:$0]  %s118, 128, %s120, [#allocation10]
    $region37: #{tpu_custom_call.1} parent=1 // pred_fallthru
      _
    // Predicated region
    $region38: #{tpu_custom_call.1} parent=1 // pred_check
      _
    $region39: #{tpu_custom_call.1} parent=1 // pred_check_branch
      %124 = sbr.rel (0) target = $region41
    $region40: #{tpu_custom_call.1} parent=1 // pred_region
      %126 = dma.done [#allocation4], 128
    $region41: #{tpu_custom_call.1} parent=1 // pred_fallthru
      _
    // Predicated region
    $region42: #{tpu_custom_call.1} parent=1 // pred_check
      _
    $region43: #{tpu_custom_call.1} parent=1 // pred_check_branch
      %128 = sbr.rel (0) target = $region45
    $region44: #{tpu_custom_call.1} parent=1 // pred_region
      %130 = dma.done [#allocation10], 128
    $region45: #{tpu_custom_call.1} parent=1 // pred_fallthru
      _
    %131 = vsyncpa [#allocation3], 1
    %132 = vsyncpa [#allocation6], 1
    %133 = vsyncpa [#allocation4], 1
    %134 = vsyncpa [#allocation10], 1

</llo_original>
